<compile_context>
chip_gen: v7x
topology: tpu7x:2x2x1
jax: 0.10.0
libtpu: 0.0.40
codegen_flags: <defaults>
</compile_context>

<pallas_src>
import jax
import jax.numpy as jnp
from jax.experimental import pallas as pl
from jax.experimental.pallas import tpu as pltpu


def adapter_kernel(x_ref, w1_ref, b1_ref, w2_ref, b2_ref, o_ref):
    # x_ref: (C, TP)       w1_ref: (hidden, C)   b1_ref: (hidden, 1)  f32
    # w2_ref: (C, hidden)  b2_ref: (C, 1) f32    o_ref:  (C, TP)
    x = x_ref[...]
    h = jnp.dot(w1_ref[...], x, preferred_element_type=jnp.float32)
    h = jnp.maximum(h + b1_ref[...], 0.0)                       # bias + ReLU (f32)
    y = jnp.dot(w2_ref[...], h.astype(w2_ref.dtype),
                preferred_element_type=jnp.float32) + b2_ref[...]
    o_ref[...] = (x.astype(jnp.float32) + y).astype(o_ref.dtype)  # residual add


def _vmem_capacity_bytes():
    """Per-core VMEM capacity; conservative v7x default if query unavailable."""
    try:
        cap = getattr(pltpu.get_tpu_info(), "vmem_capacity_bytes", None)
        if cap:
            return int(cap)
    except Exception:
        pass
    return 64 << 20


def adapter_forward(x_nchw, w1, b1, w2, b2, *, tile_p=1024, io_dtype=None,
                    buffer_count=2, alias_input=True):
    """AdapterModule forward.

    x_nchw: (N, C, H, W).  w1: (hidden, C), b1: (hidden,), w2: (C, hidden),
    b2: (C,)  -- exactly the squeezed PyTorch Conv2d weights weight[:, :, 0, 0].
    io_dtype: optional streaming dtype (e.g. jnp.bfloat16) for x / w1 / w2;
    accumulation and biases stay f32.  buffer_count > 2 enables deeper
    pipelining on the streamed x / out specs (sweep only if DMA gaps show up).
    """
    N, C, H, W = x_nchw.shape
    hidden = w1.shape[0]
    P = H * W

    if io_dtype is not None:
        x_nchw = x_nchw.astype(io_dtype)
        w1 = w1.astype(io_dtype)
        w2 = w2.astype(io_dtype)
    b1_2d = b1.astype(jnp.float32).reshape(hidden, 1)
    b2_2d = b2.astype(jnp.float32).reshape(C, 1)

    dtype = x_nchw.dtype
    itemsize = jnp.dtype(dtype).itemsize
    w_itemsize = jnp.dtype(w1.dtype).itemsize
    sub = 8 * (4 // itemsize)            # min sublane tile: 8 (f32) / 16 (bf16)
    c_pad = pl.cdiv(C, sub) * sub

    # ---- generation-aware VMEM budget ---------------------------------------
    capacity = _vmem_capacity_bytes()
    budget = min((capacity * 3) // 4, 96 << 20)   # ~48 MiB on v7x, 96 MiB v5e/v6e
    weight_bytes = (2 * (pl.cdiv(hidden, sub) * sub * pl.cdiv(C, 128) * 128
                         + c_pad * 128) * w_itemsize
                    + 2 * (hidden + C) * 4)
    avail = max(budget - weight_bytes - (4 << 20), 2 << 20)
    per_col = 2 * buffer_count * c_pad * itemsize   # in + out tiles, per lane col
    tile_p_max = max(128, (avail // per_col) // 128 * 128)

    # ---- pixel-tile size (lane axis) ----------------------------------------
    tile_p = min(max(int(tile_p), 128), tile_p_max)
    if tile_p >= P:
        tile_p = P                                   # single exact block
    else:
        tile_p = max(128, (tile_p // 128) * 128)     # lane-aligned; partial tail ok

    # Ensure >= 4 grid steps so both v7x TensorCores get work on small stages.
    def _steps(tp):
        return N * pl.cdiv(P, tp)
    while tile_p > 128 and _steps(tile_p) < 4:
        smaller = max(128, (tile_p // 2) // 128 * 128)
        if _steps(smaller) <= _steps(tile_p):
            break
        tile_p = smaller

    lane_pad = pl.cdiv(tile_p, 128) * 128
    tile_bytes = c_pad * lane_pad * itemsize
    vmem_limit = int(min(max(2 * buffer_count * tile_bytes + weight_bytes
                             + (4 << 20), 16 << 20), budget))

    x3 = x_nchw.reshape(N, C, P)          # contiguous reshape, no transpose
    grid = (N, pl.cdiv(P, tile_p))        # unpadded: Pallas masks the last block

    x_kw, o_kw = {}, {}
    if buffer_count != 2:                 # optional deeper pipelining
        x_kw = dict(pipeline_mode=pl.Buffered(buffer_count))
        o_kw = dict(pipeline_mode=pl.Buffered(buffer_count))

    cost = pl.CostEstimate(
        flops=4 * N * C * hidden * P,
        transcendentals=0,
        bytes_accessed=(2 * N * C * P * itemsize
                        + int(w1.size + w2.size) * w_itemsize
                        + int(b1.size + b2.size) * 4),
    )

    out3 = pl.pallas_call(
        adapter_kernel,
        out_shape=jax.ShapeDtypeStruct((N, C, P), dtype),
        grid_spec=pltpu.PrefetchScalarGridSpec(
            num_scalar_prefetch=0,
            grid=grid,
            in_specs=[
                pl.BlockSpec((None, C, tile_p), lambda n, p: (n, 0, p), **x_kw),
                pl.BlockSpec((hidden, C), lambda n, p: (0, 0)),      # w1 (const)
                pl.BlockSpec((hidden, 1), lambda n, p: (0, 0)),      # b1 (f32)
                pl.BlockSpec((C, hidden), lambda n, p: (0, 0)),      # w2 (const)
                pl.BlockSpec((C, 1), lambda n, p: (0, 0)),           # b2 (f32)
            ],
            out_specs=pl.BlockSpec((None, C, tile_p), lambda n, p: (n, 0, p),
                                   **o_kw),
        ),
        compiler_params=pltpu.CompilerParams(
            dimension_semantics=("parallel", "parallel"),
            vmem_limit_bytes=vmem_limit,
        ),
        cost_estimate=cost,
        # Residual output may legally overwrite the input activation: saves the
        # activation's HBM footprint when this call sits inside a jitted graph.
        input_output_aliases=({0: 0} if alias_input else {}),
    )(x3, w1, b1_2d, w2, b2_2d)

    return out3.reshape(N, C, H, W)


def reference_forward(x_nchw, w1, b1, w2, b2):
    """Pure-JAX reference matching the PyTorch AdapterModule semantics."""
    h = jnp.einsum("dc,nchw->ndhw", w1, x_nchw) + b1[None, :, None, None]
    h = jnp.maximum(h, 0.0)
    y = jnp.einsum("cd,ndhw->nchw", w2, h) + b2[None, :, None, None]
    return x_nchw + y


if __name__ == "__main__":
    key = jax.random.PRNGKey(0)
    k_x, k_w1, k_b1, k_w2, k_b2, k_x2 = jax.random.split(key, 6)

    # Shapes consistent with AdapterModule(input_dim=64, reduction_factor=16).
    N, C, H, W = 2, 64, 16, 16
    hidden = C // 16  # = 4

    x = jax.random.normal(k_x, (N, C, H, W), dtype=jnp.float32)
    # PyTorch Conv2d weight shape is (out, in, 1, 1); we store the squeezed form.
    w1 = jax.random.normal(k_w1, (hidden, C), dtype=jnp.float32) * 0.1
    b1 = jax.random.normal(k_b1, (hidden,), dtype=jnp.float32) * 0.1
    w2 = jax.random.normal(k_w2, (C, hidden), dtype=jnp.float32) * 0.1
    b2 = jax.random.normal(k_b2, (C,), dtype=jnp.float32) * 0.1

    # f32 path, exact pixel blocks.
    out = jax.block_until_ready(adapter_forward(x, w1, b1, w2, b2))
    ref = jax.block_until_ready(reference_forward(x, w1, b1, w2, b2))
    assert out.shape == (N, C, H, W)
    assert jnp.allclose(out, ref, atol=1e-4, rtol=1e-4), "f32 mismatch vs reference"

    # Partial trailing pixel block (P = 14*14 = 196, tile_p = 128): exercises
    # the unpadded grid where Pallas masks the last block (no pad / no slice).
    xp = jax.random.normal(k_x2, (N, C, 14, 14), dtype=jnp.float32)
    out_p = jax.block_until_ready(adapter_forward(xp, w1, b1, w2, b2, tile_p=128))
    ref_p = reference_forward(xp, w1, b1, w2, b2)
    assert jnp.allclose(out_p, ref_p, atol=1e-4, rtol=1e-4), "partial-block mismatch"

    # bf16 streaming path (f32 accumulation + f32 residual add inside kernel).
    out_bf = jax.block_until_ready(
        adapter_forward(x, w1, b1, w2, b2, io_dtype=jnp.bfloat16))
    assert jnp.allclose(out_bf.astype(jnp.float32), ref, atol=1e-1, rtol=5e-2), \
        "bf16 mismatch vs reference"

    print("KERNEL_OK")
</pallas_src>

<mosaic_0001>
module attributes {stable_mosaic.version = 11 : i64} {
  func.func @adapter_kernel(%arg0: i32, %arg1: i32, %arg2: memref<1x64x128xf32, #tpu.memory_space<vmem>>, %arg3: memref<4x64xf32, #tpu.memory_space<vmem>>, %arg4: memref<4x1xf32, #tpu.memory_space<vmem>>, %arg5: memref<64x4xf32, #tpu.memory_space<vmem>>, %arg6: memref<64x1xf32, #tpu.memory_space<vmem>>, %arg7: memref<1x64x128xf32, #tpu.memory_space<vmem>>) attributes {dimension_semantics = [#tpu.dimension_semantics<parallel>, #tpu.dimension_semantics<parallel>], iteration_bounds = array<i64: 2, 2>, scalar_prefetch = 0 : i64, scratch_operands = 0 : i64, tpu.core_type = #tpu.core_type<tc>, window_params = [{transform_indices = @transform_0, window_bounds = array<i64: 1, 64, 128>}, {pipeline_mode = #tpu.pipeline_mode<synchronous>, transform_indices = @transform_1, window_bounds = array<i64: 4, 64>}, {pipeline_mode = #tpu.pipeline_mode<synchronous>, transform_indices = @transform_2, window_bounds = array<i64: 4, 1>}, {pipeline_mode = #tpu.pipeline_mode<synchronous>, transform_indices = @transform_3, window_bounds = array<i64: 64, 4>}, {pipeline_mode = #tpu.pipeline_mode<synchronous>, transform_indices = @transform_4, window_bounds = array<i64: 64, 1>}, {transform_indices = @transform_5, window_bounds = array<i64: 1, 64, 128>}]} {
    %c0 = arith.constant 0 : index
    %c0_0 = arith.constant 0 : index
    %c0_1 = arith.constant 0 : index
    %0 = vector.load %arg2[%c0, %c0_0, %c0_1] : memref<1x64x128xf32, #tpu.memory_space<vmem>>, vector<1x64x128xf32>
    %1 = vector.shape_cast %0 : vector<1x64x128xf32> to vector<64x128xf32>
    %c0_2 = arith.constant 0 : index
    %c0_3 = arith.constant 0 : index
    %2 = vector.load %arg3[%c0_2, %c0_3] : memref<4x64xf32, #tpu.memory_space<vmem>>, vector<4x64xf32>
    %cst = arith.constant dense<0.000000e+00> : vector<4x128xf32>
    %3 = tpu.matmul %2, %1, %cst {dimension_numbers = #tpu.dot_dimension_numbers<[1], [0], [0], [1], [0, 0, 1, 1], [], []>} : vector<4x64xf32>, vector<64x128xf32>, vector<4x128xf32> -> vector<4x128xf32>
    %c0_4 = arith.constant 0 : index
    %c0_5 = arith.constant 0 : index
    %4 = vector.load %arg4[%c0_4, %c0_5] : memref<4x1xf32, #tpu.memory_space<vmem>>, vector<4x1xf32>
    %5 = vector.broadcast %4 : vector<4x1xf32> to vector<4x128xf32>
    %6 = arith.addf %3, %5 : vector<4x128xf32>
    %cst_6 = arith.constant 0.000000e+00 : f32
    %7 = vector.broadcast %cst_6 : f32 to vector<4x128xf32>
    %8 = arith.maximumf %6, %7 : vector<4x128xf32>
    %c0_7 = arith.constant 0 : index
    %c0_8 = arith.constant 0 : index
    %9 = vector.load %arg5[%c0_7, %c0_8] : memref<64x4xf32, #tpu.memory_space<vmem>>, vector<64x4xf32>
    %cst_9 = arith.constant dense<0.000000e+00> : vector<64x128xf32>
    %10 = tpu.matmul %9, %8, %cst_9 {dimension_numbers = #tpu.dot_dimension_numbers<[1], [0], [0], [1], [0, 0, 1, 1], [], []>} : vector<64x4xf32>, vector<4x128xf32>, vector<64x128xf32> -> vector<64x128xf32>
    %c0_10 = arith.constant 0 : index
    %c0_11 = arith.constant 0 : index
    %11 = vector.load %arg6[%c0_10, %c0_11] : memref<64x1xf32, #tpu.memory_space<vmem>>, vector<64x1xf32>
    %12 = vector.broadcast %11 : vector<64x1xf32> to vector<64x128xf32>
    %13 = arith.addf %10, %12 : vector<64x128xf32>
    %14 = arith.addf %1, %13 : vector<64x128xf32>
    %c0_12 = arith.constant 0 : index
    %c0_13 = arith.constant 0 : index
    %c0_14 = arith.constant 0 : index
    %15 = vector.load %arg7[%c0_12, %c0_13, %c0_14] : memref<1x64x128xf32, #tpu.memory_space<vmem>>, vector<1x64x128xf32>
    %16 = vector.shape_cast %15 : vector<1x64x128xf32> to vector<64x128xf32>
    %17 = vector.shape_cast %14 : vector<64x128xf32> to vector<1x64x128xf32>
    tpu.vector_store %arg7[%c0_12, %c0_13, %c0_14], %17 {strides = array<i32>} : memref<1x64x128xf32, #tpu.memory_space<vmem>>, vector<1x64x128xf32>,
    return
  }
  func.func @transform_0(%arg0: i32, %arg1: i32) -> (i32, i32, i32) {
    %c0_i32 = arith.constant 0 : i32
    %c0_i32_0 = arith.constant 0 : i32
    return %arg0, %c0_i32, %arg1 : i32, i32, i32
  }
  func.func @transform_1(%arg0: i32, %arg1: i32) -> (i32, i32) {
    %c0_i32 = arith.constant 0 : i32
    %c0_i32_0 = arith.constant 0 : i32
    %c0_i32_1 = arith.constant 0 : i32
    return %c0_i32, %c0_i32_0 : i32, i32
  }
  func.func @transform_2(%arg0: i32, %arg1: i32) -> (i32, i32) {
    %c0_i32 = arith.constant 0 : i32
    %c0_i32_0 = arith.constant 0 : i32
    %c0_i32_1 = arith.constant 0 : i32
    return %c0_i32, %c0_i32_0 : i32, i32
  }
  func.func @transform_3(%arg0: i32, %arg1: i32) -> (i32, i32) {
    %c0_i32 = arith.constant 0 : i32
    %c0_i32_0 = arith.constant 0 : i32
    %c0_i32_1 = arith.constant 0 : i32
    return %c0_i32, %c0_i32_0 : i32, i32
  }
  func.func @transform_4(%arg0: i32, %arg1: i32) -> (i32, i32) {
    %c0_i32 = arith.constant 0 : i32
    %c0_i32_0 = arith.constant 0 : i32
    %c0_i32_1 = arith.constant 0 : i32
    return %c0_i32, %c0_i32_0 : i32, i32
  }
  func.func @transform_5(%arg0: i32, %arg1: i32) -> (i32, i32, i32) {
    %c0_i32 = arith.constant 0 : i32
    %c0_i32_0 = arith.constant 0 : i32
    return %arg0, %c0_i32, %arg1 : i32, i32, i32
  }
}

</mosaic_0001>

<llo_original>
// kernel: tpu_custom_call.1
$region0: #{tpu_custom_call.1}
  #allocation0 [shape = 'u32[]', space=smem, size = 0x4, offset = 0x4, fixed_abs, tag = 'smem constant byte address 0x4 - core index']
  #allocation1 [shape = 'u32[144,128]{1,0:T(1,128)}', space=vmem, size = 0x12000, scoped, tag = 'internal scratch']
  %s0 = inlined_call_operand.hbm [shape: f32[2,64,256], index: 0, kind: input, shape index: {}, may-alias: {0,5}]
  %s1 = inlined_call_operand.vmem [shape: f32[4,64], index: 1, kind: input, shape index: {}]
  %s2 = inlined_call_operand.vmem [shape: f32[4,1], index: 2, kind: input, shape index: {}]
  %s3 = inlined_call_operand.vmem [shape: f32[64,4], index: 3, kind: input, shape index: {}]
  %s4 = inlined_call_operand.vmem [shape: f32[64,1], index: 4, kind: input, shape index: {}]
  %s5 = inlined_call_operand.hbm [shape: f32[2,64,256], index: 5, kind: output, shape index: {}, may-alias: {0,5}]
  %s6 = sld [smem:[#allocation0]]
  $region57: #{tpu_custom_call.1} parent=0
    _
  %s8 = ssub.s32 1, %s6
  %s9 = scalar_select 0, %s8, %s6
  $region1: #{tpu_custom_call.1} parent=0
    #allocation2 [shape = 'u8[65536]{0}', space=vmem, size = 0x10000, scoped, tag = 'input window, operand 0']
    #allocation3 [shape = 's32[2]{0}', space=sflag, size = 0x8, scoped, tag = 'scoped memory for tpu_custom_call.1']
    #allocation4 [shape = 's32[2]{0}', space=sflag, size = 0x8, scoped, tag = 'scoped memory for tpu_custom_call.1']
    #allocation5 [shape = 'u8[65536]{0}', space=vmem, size = 0x10000, scoped, tag = 'output window, operand 0']
    %10 = vsyncpa [#allocation3], 0
    %s11 = scalar_lea.sflag [#allocation3], 1
    %12 = vsyncpa %s11, 0
    %13 = vsyncpa [#allocation4], 0
    %s14 = scalar_lea.sflag [#allocation4], 1
    %15 = vsyncpa %s14, 0
    loop: start=0, step=1, limit=6
    $region2: #{tpu_custom_call.1} parent=1 // loop_pre_header
      _
    $region3: #{tpu_custom_call.1} parent=1 // loop_header
      %s17 = sphi 0, %s21
      %p18 = scmp.ge.s32.totalorder %s17, 6
      %s24 = sphi 0, %s36
      %s25 = sphi 0, %s32
      %s26 = sphi 0, %s24
      %s27 = sphi 0, %s25
      %s28 = sphi 0, %s26
      %s29 = sphi 0, %s27
      %s41 = sphi 0, %s43
      %s44 = sphi 0, %s41
      %s45 = sphi 0, %s44
      %s61 = sphi 0, %s45
      %s65 = sphi 0, %s65
      %s67 = sphi 0, %s65
      %s68 = sphi 0, %s67
      %s82 = sphi 0, %s68
      %s86 = sphi 0, %s86
      %s88 = sphi 0, %s86
      %s89 = sphi 0, %s88
      %s103 = sphi 0, %s89
      %s107 = sphi 0, %s107
      %s109 = sphi 0, %s107
      %s110 = sphi 0, %s109
      %s124 = sphi 0, %s110
      %s128 = sphi 0, %s128
      %s130 = sphi 0, %s128
      %s131 = sphi 0, %s130
      %s145 = sphi 0, %s131
      %s153 = sphi 0, %s155
      %s156 = sphi 0, %s153
      %s157 = sphi 0, %s156
      %s173 = sphi 0, %s157
    $region4: #{tpu_custom_call.1} parent=1 // loop_header_branch
      %20 = sbr.rel (%p18) target = $region8
    $region5: #{tpu_custom_call.1} parent=1 // loop_body
      %s22 = ssub.s32 %s17, 1
      %s23 = ssub.s32 %s17, 2
      %s30 = sadd.s32 1, %s25
      %p31 = scmp.ge.s32.totalorder %s30, 2
      %s32 = scalar_select %p31, 0, %s30
      %s33 = sadd.s32 1, %s24
      %s34 = scalar_select %p31, %s33, %s24
      %p35 = scmp.ge.s32.totalorder %s34, 2
      %s36 = scalar_select %p35, 0, %s34
      %s37 = ssub.s32 %s24, %s36
      %s38 = ssub.s32 %s25, %s32
      %s39 = sor.u32 %s37, %s38
      %p40 = scmp.eq.s32.totalorder %s39, 0
      %s42 = sadd.s32 %s41, 1
      %s43 = scalar_select %p40, %s41, %s42
      %p46 = pneg %p40
      %p47 = scmp.eq.s32.totalorder %s17, 3
      %p48 = por %p46, %p47
      %p49 = scmp.ne.s32.totalorder %s41, %s44
      %p50 = scmp.eq.s32.totalorder %s17, 0
      %p51 = por %p49, %p50
      %p52 = scmp.ne.s32.totalorder %s41, %s44
      %p53 = scmp.eq.s32.totalorder %s22, 3
      %p54 = por %p52, %p53
      %p55 = scmp.ne.s32.totalorder %s44, %s45
      %p56 = scmp.eq.s32.totalorder %s22, 0
      %p57 = por %p55, %p56
      %p58 = scmp.ne.s32.totalorder %s44, %s45
      %p59 = scmp.eq.s32.totalorder %s23, 3
      %p60 = por %p58, %p59
      %p62 = scmp.ne.s32.totalorder %s45, %s61
      %p63 = scmp.eq.s32.totalorder %s23, 0
      %p64 = por %p62, %p63
      %s66 = sadd.s32 %s65, 1
      %p69 = scmp.eq.s32.totalorder %s17, 3
      %p70 = scmp.ne.s32.totalorder %s65, %s67
      %p71 = scmp.eq.s32.totalorder %s17, 0
      %p72 = por %p70, %p71
      %p73 = scmp.ne.s32.totalorder %s65, %s67
      %p74 = scmp.eq.s32.totalorder %s22, 3
      %p75 = por %p73, %p74
      %p76 = scmp.ne.s32.totalorder %s67, %s68
      %p77 = scmp.eq.s32.totalorder %s22, 0
      %p78 = por %p76, %p77
      %p79 = scmp.ne.s32.totalorder %s67, %s68
      %p80 = scmp.eq.s32.totalorder %s23, 3
      %p81 = por %p79, %p80
      %p83 = scmp.ne.s32.totalorder %s68, %s82
      %p84 = scmp.eq.s32.totalorder %s23, 0
      %p85 = por %p83, %p84
      %s87 = sadd.s32 %s86, 1
      %p90 = scmp.eq.s32.totalorder %s17, 3
      %p91 = scmp.ne.s32.totalorder %s86, %s88
      %p92 = scmp.eq.s32.totalorder %s17, 0
      %p93 = por %p91, %p92
      %p94 = scmp.ne.s32.totalorder %s86, %s88
      %p95 = scmp.eq.s32.totalorder %s22, 3
      %p96 = por %p94, %p95
      %p97 = scmp.ne.s32.totalorder %s88, %s89
      %p98 = scmp.eq.s32.totalorder %s22, 0
      %p99 = por %p97, %p98
      %p100 = scmp.ne.s32.totalorder %s88, %s89
      %p101 = scmp.eq.s32.totalorder %s23, 3
      %p102 = por %p100, %p101
      %p104 = scmp.ne.s32.totalorder %s89, %s103
      %p105 = scmp.eq.s32.totalorder %s23, 0
      %p106 = por %p104, %p105
      %s108 = sadd.s32 %s107, 1
      %p111 = scmp.eq.s32.totalorder %s17, 3
      %p112 = scmp.ne.s32.totalorder %s107, %s109
      %p113 = scmp.eq.s32.totalorder %s17, 0
      %p114 = por %p112, %p113
      %p115 = scmp.ne.s32.totalorder %s107, %s109
      %p116 = scmp.eq.s32.totalorder %s22, 3
      %p117 = por %p115, %p116
      %p118 = scmp.ne.s32.totalorder %s109, %s110
      %p119 = scmp.eq.s32.totalorder %s22, 0
      %p120 = por %p118, %p119
      %p121 = scmp.ne.s32.totalorder %s109, %s110
      %p122 = scmp.eq.s32.totalorder %s23, 3
      %p123 = por %p121, %p122
      %p125 = scmp.ne.s32.totalorder %s110, %s124
      %p126 = scmp.eq.s32.totalorder %s23, 0
      %p127 = por %p125, %p126
      %s129 = sadd.s32 %s128, 1
      %p132 = scmp.eq.s32.totalorder %s17, 3
      %p133 = scmp.ne.s32.totalorder %s128, %s130
      %p134 = scmp.eq.s32.totalorder %s17, 0
      %p135 = por %p133, %p134
      %p136 = scmp.ne.s32.totalorder %s128, %s130
      %p137 = scmp.eq.s32.totalorder %s22, 3
      %p138 = por %p136, %p137
      %p139 = scmp.ne.s32.totalorder %s130, %s131
      %p140 = scmp.eq.s32.totalorder %s22, 0
      %p141 = por %p139, %p140
      %p142 = scmp.ne.s32.totalorder %s130, %s131
      %p143 = scmp.eq.s32.totalorder %s23, 3
      %p144 = por %p142, %p143
      %p146 = scmp.ne.s32.totalorder %s131, %s145
      %p147 = scmp.eq.s32.totalorder %s23, 0
      %p148 = por %p146, %p147
      %s149 = ssub.s32 %s24, %s36
      %s150 = ssub.s32 %s25, %s32
      %s151 = sor.u32 %s149, %s150
      %p152 = scmp.eq.s32.totalorder %s151, 0
      %s154 = sadd.s32 %s153, 1
      %s155 = scalar_select %p152, %s153, %s154
      %p158 = pneg %p152
      %p159 = scmp.eq.s32.totalorder %s17, 3
      %p160 = por %p158, %p159
      %p161 = scmp.ne.s32.totalorder %s153, %s156
      %p162 = scmp.eq.s32.totalorder %s17, 0
      %p163 = por %p161, %p162
      %p164 = scmp.ne.s32.totalorder %s153, %s156
      %p165 = scmp.eq.s32.totalorder %s22, 3
      %p166 = por %p164, %p165
      %p167 = scmp.ne.s32.totalorder %s156, %s157
      %p168 = scmp.eq.s32.totalorder %s22, 0
      %p169 = por %p167, %p168
      %p170 = scmp.ne.s32.totalorder %s156, %s157
      %p171 = scmp.eq.s32.totalorder %s23, 3
      %p172 = por %p170, %p171
      %p174 = scmp.ne.s32.totalorder %s157, %s173
      %p175 = scmp.eq.s32.totalorder %s23, 0
      %p176 = por %p174, %p175
      %p177 = scmp.le.s32.totalorder 1, %s17
      %p178 = scmp.lt.s32.totalorder %s17, 5
      %p179 = pnand %p177, %p178
      %p180 = pneg %p179
      // Predicated region
      $region9: #{tpu_custom_call.1} parent=5 // pred_check
        _
      $region10: #{tpu_custom_call.1} parent=5 // pred_check_branch
        %182 = sbr.rel (%p179) target = $region12
      $region11: #{tpu_custom_call.1} parent=5 // pred_region
        %s183 = ssub.s32 %s17, 1
        // Predicated region
        $region13: #{tpu_custom_call.1} parent=11 // pred_check
          %p184 = pneg %p78
        $region14: #{tpu_custom_call.1} parent=11 // pred_check_branch
          %186 = sbr.rel (%p184) target = $region16
        $region15: #{tpu_custom_call.1} parent=11 // pred_region
          _
        $region16: #{tpu_custom_call.1} parent=11 // pred_fallthru
          _
        // Predicated region
        $region17: #{tpu_custom_call.1} parent=11 // pred_check
          %p187 = pneg %p99
        $region18: #{tpu_custom_call.1} parent=11 // pred_check_branch
          %189 = sbr.rel (%p187) target = $region20
        $region19: #{tpu_custom_call.1} parent=11 // pred_region
          _
        $region20: #{tpu_custom_call.1} parent=11 // pred_fallthru
          _
        // Predicated region
        $region21: #{tpu_custom_call.1} parent=11 // pred_check
          %p190 = pneg %p120
        $region22: #{tpu_custom_call.1} parent=11 // pred_check_branch
          %192 = sbr.rel (%p190) target = $region24
        $region23: #{tpu_custom_call.1} parent=11 // pred_region
          _
        $region24: #{tpu_custom_call.1} parent=11 // pred_fallthru
          _
        // Predicated region
        $region25: #{tpu_custom_call.1} parent=11 // pred_check
          %p193 = pneg %p141
        $region26: #{tpu_custom_call.1} parent=11 // pred_check_branch
          %195 = sbr.rel (%p193) target = $region28
        $region27: #{tpu_custom_call.1} parent=11 // pred_region
          _
        $region28: #{tpu_custom_call.1} parent=11 // pred_fallthru
          _
      $region12: #{tpu_custom_call.1} parent=5 // pred_fallthru
        _
      %p196 = scmp.lt.s32.totalorder %s17, 4
      // Predicated region
      $region29: #{tpu_custom_call.1} parent=5 // pred_check
        %p197 = pneg %p196
      $region30: #{tpu_custom_call.1} parent=5 // pred_check_branch
        %199 = sbr.rel (%p197) target = $region32
      $region31: #{tpu_custom_call.1} parent=5 // pred_region
        // Predicated region
        $region33: #{tpu_custom_call.1} parent=31 // pred_check
          %p200 = pneg %p51
        $region34: #{tpu_custom_call.1} parent=31 // pred_check_branch
          %202 = sbr.rel (%p200) target = $region36
        $region35: #{tpu_custom_call.1} parent=31 // pred_region
          %s203 = sand.u32 %s41, 1
          %s204 = scalar_lea.sflag [#allocation3], %s203
          %s205 = sand.u32 %s41, 1
          %s206 = smul.addr %s205, 64
          %s207 = scalar_lea.vmem [#allocation2], %s206
          %s209 = ssub.s32 1024, 1024
          %210 = vsyncadd %s204, %s209
          %s211 = smul.addr %s24, 16
          %s212 = sadd.s32 %s25, %s211
          %s213 = smul.addr %s212, 128
          %s214 = scalar_lea.hbm %s0, %s213
          %s215 = sshll.u32 %s207, 4
          %s216 = int_to_ptr.vmem [resolvable:$true] %s215
          %221 = dma.hbm_to_vmem [thread:$0]  %s214, 1024, %s216, %s204, 256, 128, 8
        $region36: #{tpu_custom_call.1} parent=31 // pred_fallthru
          _
      $region32: #{tpu_custom_call.1} parent=5 // pred_fallthru
        _
      %p222 = scmp.le.s32.totalorder 1, %s17
      %p223 = scmp.lt.s32.totalorder %s17, 5
      %p224 = pnand %p222, %p223
      %p225 = pneg %p224
      // Predicated region
      $region37: #{tpu_custom_call.1} parent=5 // pred_check
        _
      $region38: #{tpu_custom_call.1} parent=5 // pred_check_branch
        %227 = sbr.rel (%p224) target = $region40
      $region39: #{tpu_custom_call.1} parent=5 // pred_region
        %s228 = ssub.s32 %s17, 1
        %s229 = sand.u32 %s44, 1
        %s230 = scalar_lea.sflag [#allocation3], %s229
        %s231 = sand.u32 %s44, 1
        %s232 = smul.addr %s231, 64
        %s233 = scalar_lea.vmem [#allocation2], %s232
        // Predicated region
        $region41: #{tpu_custom_call.1} parent=39 // pred_check
          %p234 = pneg %p57
        $region42: #{tpu_custom_call.1} parent=39 // pred_check_branch
          %236 = sbr.rel (%p234) target = $region44
        $region43: #{tpu_custom_call.1} parent=39 // pred_region
          %237 = dma.done %s230, 1024
        $region44: #{tpu_custom_call.1} parent=39 // pred_fallthru
          _
        %s238 = sand.u32 %s44, 1
        %s239 = scalar_lea.sflag [#allocation3], %s238
        %s240 = sand.u32 %s44, 1
        %s241 = smul.addr %s240, 64
        %s242 = scalar_lea.vmem [#allocation2], %s241
        %p243 = pneg %p57
        %p244 = pneg %p54
        %p245 = pneg %p78
        %p246 = pneg %p75
        %p247 = pneg %p99
        %p248 = pneg %p96
        %p249 = pneg %p120
        %p250 = pneg %p117
        %p251 = pneg %p141
        %p252 = pneg %p138
        %p253 = pneg %p169
        %p254 = pneg %p166
        %s255 = sand.u32 %s156, 1
        %s256 = scalar_lea.sflag [#allocation4], %s255
        %s257 = sand.u32 %s156, 1
        %s258 = smul.addr %s257, 64
        %s259 = scalar_lea.vmem [#allocation5], %s258
        %v260 = vld [vmem:[%s233] sm:$0xff]
        %v261 = vld [vmem:[%s233 + $0x8] sm:$0xff]
        %v262 = vld [vmem:[%s233 + $0x10] sm:$0xff]
        %v263 = vld [vmem:[%s233 + $0x18] sm:$0xff]
        %v264 = vld [vmem:[%s233 + $0x20] sm:$0xff]
        %v265 = vld [vmem:[%s233 + $0x28] sm:$0xff]
        %v266 = vld [vmem:[%s233 + $0x30] sm:$0xff]
        %v267 = vld [vmem:[%s233 + $0x38] sm:$0xff]
        %v268 = vld [vmem:[%s1] sm:$0xf]
        %v269 = vld [vmem:[%s2] sm:$0xf]
        %271 = vset.pattern.permute.xlu0 0
        %272 = vperm.xlu0 %271, %v269
        %v273 = vpop.permute.xlu0 %272
        %vm275 = vcmask 523264
        %v277 = vsel %vm275, %v268, 0
        %279 = vmatprep.subr.mxu0 0.0
        %280 = vmatpush1.msra.mxu0 %v260
        %281 = vmatprep.subr.mxu0 0.0
        %282 = vmatpush1.msra.mxu0 %v261
        %283 = vmatprep.subr.mxu0 0.0
        %284 = vmatpush1.msra.mxu0 %v262
        %285 = vmatprep.subr.mxu0 0.0
        %286 = vmatpush1.msra.mxu0 %v263
        %287 = vmatprep.subr.mxu0 0.0
        %288 = vmatpush1.msra.mxu0 %v264
        %289 = vmatprep.subr.mxu0 0.0
        %290 = vmatpush1.msra.mxu0 %v265
        %291 = vmatprep.subr.mxu0 0.0
        %292 = vmatpush1.msra.mxu0 %v266
        %293 = vmatprep.subr.mxu0 0.0
        %294 = vmatpush1.msra.mxu0 %v267
        %295 = vmatprep.subr.mxu0 0.0
        %296 = vmatpush1.msra.mxu0 0.0
        %297 = vmatprep.subr.mxu0 0.0
        %298 = vmatpush1.msra.mxu0 0.0
        %299 = vmatprep.subr.mxu0 0.0
        %300 = vmatpush1.msra.mxu0 0.0
        %301 = vmatprep.subr.mxu0 0.0
        %302 = vmatpush1.msra.mxu0 0.0
        %303 = vmatprep.subr.mxu0 0.0
        %304 = vmatpush1.msra.mxu0 0.0
        %305 = vmatprep.subr.mxu0 0.0
        %306 = vmatpush1.msra.mxu0 0.0
        %307 = vmatprep.subr.mxu0 0.0
        %308 = vmatpush1.msra.mxu0 0.0
        %309 = vmatprep.subr.mxu0 0.0
        %310 = vmatpush1.msra.mxu0 0.0
        %311 = vmatprep.subr.mxu0 0.0
        %312 = vmatpush1.msra.mxu0 0.0
        %313 = vmatprep.subr.mxu0 0.0
        %314 = vmatpush1.msra.mxu0 0.0
        %315 = vmatprep.subr.mxu0 0.0
        %316 = vmatpush1.msra.mxu0 0.0
        %317 = vmatprep.subr.mxu0 0.0
        %318 = vmatpush1.msra.mxu0 0.0
        %319 = vmatprep.subr.mxu0 0.0
        %320 = vmatpush1.msra.mxu0 0.0
        %321 = vmatprep.subr.mxu0 0.0
        %322 = vmatpush1.msra.mxu0 0.0
        %323 = vmatprep.subr.mxu0 0.0
        %324 = vmatpush1.msra.mxu0 0.0
        %325 = vmatprep.subr.mxu0 0.0
        %326 = vmatpush1.msra.mxu0 0.0
        %327 = vmatprep.subr.mxu0 0.0
        %328 = vmatpush1.msra.mxu0 0.0
        %329 = vmatprep.subr.mxu0 0.0
        %330 = vmatpush1.msra.mxu0 0.0
        %331 = vmatprep.subr.mxu0 0.0
        %332 = vmatpush1.msra.mxu0 0.0
        %333 = vmatprep.subr.mxu0 0.0
        %334 = vmatpush1.msra.mxu0 0.0
        %335 = vmatprep.subr.mxu0 0.0
        %336 = vmatpush1.msra.mxu0 0.0
        %337 = vmatprep.subr.mxu0 0.0
        %338 = vmatpush1.msra.mxu0 0.0
        %339 = vmatprep.subr.mxu0 0.0
        %340 = vmatpush1.msra.mxu0 0.0
        %341 = vmatprep.subr.mxu0 0.0
        %342 = vmatpush1.msra.mxu0 0.0
        %343 = vmatprep.mubr.f32.mxu0 0.0
        %344 = vmatmul.mubr.f32.gmra.mrb[0].mxu0 %v277
        %v345 = vpop.f32.mrb[0].mxu0
        %v346 = vadd.f32 %v273, %v345
        %v347 = vpop.f32.mrb[0].mxu0
        %348 = vdwg.mxu0
        %v349 = vmax.f32 %v346, 0.0
        %v350 = vld [vmem:[%s3] sm:$0xff]
        %v351 = vld [vmem:[%s3 + $0x8] sm:$0xff]
        %v352 = vld [vmem:[%s3 + $0x10] sm:$0xff]
        %v353 = vld [vmem:[%s3 + $0x18] sm:$0xff]
        %v354 = vld [vmem:[%s3 + $0x20] sm:$0xff]
        %v355 = vld [vmem:[%s3 + $0x28] sm:$0xff]
        %v356 = vld [vmem:[%s3 + $0x30] sm:$0xff]
        %v357 = vld [vmem:[%s3 + $0x38] sm:$0xff]
        %v358 = vld [vmem:[%s4] sm:$0xff]
        %v359 = vld [vmem:[%s4 + $0x8] sm:$0xff]
        %v360 = vld [vmem:[%s4 + $0x10] sm:$0xff]
        %v361 = vld [vmem:[%s4 + $0x18] sm:$0xff]
        %v362 = vld [vmem:[%s4 + $0x20] sm:$0xff]
        %v363 = vld [vmem:[%s4 + $0x28] sm:$0xff]
        %v364 = vld [vmem:[%s4 + $0x30] sm:$0xff]
        %v365 = vld [vmem:[%s4 + $0x38] sm:$0xff]
        %367 = vset.pattern.permute.xlu0 0
        %368 = vperm.xlu0 %367, %v358
        %v369 = vpop.permute.xlu0 %368
        %372 = vset.pattern.permute.xlu0 0
        %373 = vperm.xlu0 %372, %v359
        %v374 = vpop.permute.xlu0 %373
        %377 = vset.pattern.permute.xlu0 0
        %378 = vperm.xlu0 %377, %v360
        %v379 = vpop.permute.xlu0 %378
        %382 = vset.pattern.permute.xlu0 0
        %383 = vperm.xlu0 %382, %v361
        %v384 = vpop.permute.xlu0 %383
        %387 = vset.pattern.permute.xlu0 0
        %388 = vperm.xlu0 %387, %v362
        %v389 = vpop.permute.xlu0 %388
        %392 = vset.pattern.permute.xlu0 0
        %393 = vperm.xlu0 %392, %v363
        %v394 = vpop.permute.xlu0 %393
        %397 = vset.pattern.permute.xlu0 0
        %398 = vperm.xlu0 %397, %v364
        %v399 = vpop.permute.xlu0 %398
        %402 = vset.pattern.permute.xlu0 0
        %403 = vperm.xlu0 %402, %v365
        %v404 = vpop.permute.xlu0 %403
        %vm406 = vcmask 31744
        %v408 = vsel %vm406, %v350, 0
        %v411 = vsel %vm406, %v351, 0
        %v414 = vsel %vm406, %v352, 0
        %v417 = vsel %vm406, %v353, 0
        %v420 = vsel %vm406, %v354, 0
        %v423 = vsel %vm406, %v355, 0
        %v426 = vsel %vm406, %v356, 0
        %v429 = vsel %vm406, %v357, 0
        %vm431 = vcmask 1043456
        %v433 = vsel %vm431, %v349, 0
        %435 = vmatprep.subr.mxu0 0.0
        %436 = vmatpush1.msra.mxu0 %v433
        %437 = vmatprep.subr.mxu0 0.0
        %438 = vmatpush1.msra.mxu0 0.0
        %439 = vmatprep.subr.mxu0 0.0
        %440 = vmatpush1.msra.mxu0 0.0
        %441 = vmatprep.subr.mxu0 0.0
        %442 = vmatpush1.msra.mxu0 0.0
        %443 = vmatprep.subr.mxu0 0.0
        %444 = vmatpush1.msra.mxu0 0.0
        %445 = vmatprep.subr.mxu0 0.0
        %446 = vmatpush1.msra.mxu0 0.0
        %447 = vmatprep.subr.mxu0 0.0
        %448 = vmatpush1.msra.mxu0 0.0
        %449 = vmatprep.subr.mxu0 0.0
        %450 = vmatpush1.msra.mxu0 0.0
        %451 = vmatprep.subr.mxu0 0.0
        %452 = vmatpush1.msra.mxu0 0.0
        %453 = vmatprep.subr.mxu0 0.0
        %454 = vmatpush1.msra.mxu0 0.0
        %455 = vmatprep.subr.mxu0 0.0
        %456 = vmatpush1.msra.mxu0 0.0
        %457 = vmatprep.subr.mxu0 0.0
        %458 = vmatpush1.msra.mxu0 0.0
        %459 = vmatprep.subr.mxu0 0.0
        %460 = vmatpush1.msra.mxu0 0.0
        %461 = vmatprep.subr.mxu0 0.0
        %462 = vmatpush1.msra.mxu0 0.0
        %463 = vmatprep.subr.mxu0 0.0
        %464 = vmatpush1.msra.mxu0 0.0
        %465 = vmatprep.subr.mxu0 0.0
        %466 = vmatpush1.msra.mxu0 0.0
        %467 = vmatprep.subr.mxu0 0.0
        %468 = vmatpush1.msra.mxu0 0.0
        %469 = vmatprep.subr.mxu0 0.0
        %470 = vmatpush1.msra.mxu0 0.0
        %471 = vmatprep.subr.mxu0 0.0
        %472 = vmatpush1.msra.mxu0 0.0
        %473 = vmatprep.subr.mxu0 0.0
        %474 = vmatpush1.msra.mxu0 0.0
        %475 = vmatprep.subr.mxu0 0.0
        %476 = vmatpush1.msra.mxu0 0.0
        %477 = vmatprep.subr.mxu0 0.0
        %478 = vmatpush1.msra.mxu0 0.0
        %479 = vmatprep.subr.mxu0 0.0
        %480 = vmatpush1.msra.mxu0 0.0
        %481 = vmatprep.subr.mxu0 0.0
        %482 = vmatpush1.msra.mxu0 0.0
        %483 = vmatprep.subr.mxu0 0.0
        %484 = vmatpush1.msra.mxu0 0.0
        %485 = vmatprep.subr.mxu0 0.0
        %486 = vmatpush1.msra.mxu0 0.0
        %487 = vmatprep.subr.mxu0 0.0
        %488 = vmatpush1.msra.mxu0 0.0
        %489 = vmatprep.subr.mxu0 0.0
        %490 = vmatpush1.msra.mxu0 0.0
        %491 = vmatprep.subr.mxu0 0.0
        %492 = vmatpush1.msra.mxu0 0.0
        %493 = vmatprep.subr.mxu0 0.0
        %494 = vmatpush1.msra.mxu0 0.0
        %495 = vmatprep.subr.mxu0 0.0
        %496 = vmatpush1.msra.mxu0 0.0
        %497 = vmatprep.subr.mxu0 0.0
        %498 = vmatpush1.msra.mxu0 0.0
        %499 = vmatprep.mubr.f32.mxu0 0.0
        %500 = vmatmul.mubr.f32.gmra.mrb[0].mxu0 %v408
        %v501 = vpop.f32.mrb[0].mxu0
        %v502 = vadd.f32 %v369, %v501
        %v503 = vpop.f32.mrb[0].mxu0
        %504 = vmatprep.mubr.f32.mxu0 0.0
        %505 = vmatmul.mubr.f32.gmra.mrb[0].mxu0 %v411
        %v506 = vpop.f32.mrb[0].mxu0
        %v507 = vadd.f32 %v374, %v506
        %v508 = vpop.f32.mrb[0].mxu0
        %509 = vmatprep.mubr.f32.mxu0 0.0
        %510 = vmatmul.mubr.f32.gmra.mrb[0].mxu0 %v414
        %v511 = vpop.f32.mrb[0].mxu0
        %v512 = vadd.f32 %v379, %v511
        %v513 = vpop.f32.mrb[0].mxu0
        %514 = vmatprep.mubr.f32.mxu0 0.0
        %515 = vmatmul.mubr.f32.gmra.mrb[0].mxu0 %v417
        %v516 = vpop.f32.mrb[0].mxu0
        %v517 = vadd.f32 %v384, %v516
        %v518 = vpop.f32.mrb[0].mxu0
        %519 = vmatprep.mubr.f32.mxu0 0.0
        %520 = vmatmul.mubr.f32.gmra.mrb[0].mxu0 %v420
        %v521 = vpop.f32.mrb[0].mxu0
        %v522 = vadd.f32 %v389, %v521
        %v523 = vpop.f32.mrb[0].mxu0
        %524 = vmatprep.mubr.f32.mxu0 0.0
        %525 = vmatmul.mubr.f32.gmra.mrb[0].mxu0 %v423
        %v526 = vpop.f32.mrb[0].mxu0
        %v527 = vadd.f32 %v394, %v526
        %v528 = vpop.f32.mrb[0].mxu0
        %529 = vmatprep.mubr.f32.mxu0 0.0
        %530 = vmatmul.mubr.f32.gmra.mrb[0].mxu0 %v426
        %v531 = vpop.f32.mrb[0].mxu0
        %v532 = vadd.f32 %v399, %v531
        %v533 = vpop.f32.mrb[0].mxu0
        %534 = vmatprep.mubr.f32.mxu0 0.0
        %535 = vmatmul.mubr.f32.gmra.mrb[0].mxu0 %v429
        %v536 = vpop.f32.mrb[0].mxu0
        %v537 = vadd.f32 %v404, %v536
        %v538 = vpop.f32.mrb[0].mxu0
        %539 = vdwg.mxu0
        %v540 = vadd.f32 %v260, %v502
        %v541 = vadd.f32 %v261, %v507
        %v542 = vadd.f32 %v262, %v512
        %v543 = vadd.f32 %v263, %v517
        %v544 = vadd.f32 %v264, %v522
        %v545 = vadd.f32 %v265, %v527
        %v546 = vadd.f32 %v266, %v532
        %v547 = vadd.f32 %v267, %v537
        %548 = vst [vmem:[%s259] sm:$0xff] %v540
        %549 = vst [vmem:[%s259 + $0x8] sm:$0xff] %v541
        %550 = vst [vmem:[%s259 + $0x10] sm:$0xff] %v542
        %551 = vst [vmem:[%s259 + $0x18] sm:$0xff] %v543
        %552 = vst [vmem:[%s259 + $0x20] sm:$0xff] %v544
        %553 = vst [vmem:[%s259 + $0x28] sm:$0xff] %v545
        %554 = vst [vmem:[%s259 + $0x30] sm:$0xff] %v546
        %555 = vst [vmem:[%s259 + $0x38] sm:$0xff] %v547
        %s556 = sand.u32 %s156, 1
        %s557 = scalar_lea.sflag [#allocation4], %s556
        %s558 = sand.u32 %s156, 1
        %s559 = smul.addr %s558, 64
        %s560 = scalar_lea.vmem [#allocation5], %s559
        // Predicated region
        $region45: #{tpu_custom_call.1} parent=39 // pred_check
          %p561 = pneg %p166
        $region46: #{tpu_custom_call.1} parent=39 // pred_check_branch
          %563 = sbr.rel (%p561) target = $region48
        $region47: #{tpu_custom_call.1} parent=39 // pred_region
          %s565 = ssub.s32 1024, 1024
          %566 = vsyncadd %s557, %s565
          %s567 = smul.addr %s26, 16
          %s568 = sadd.s32 %s27, %s567
          %s569 = smul.addr %s568, 128
          %s570 = scalar_lea.hbm %s5, %s569
          %s571 = sshll.u32 %s560, 4
          %s572 = int_to_ptr.vmem [resolvable:$true] %s571
          %577 = dma.vmem_to_hbm [thread:$0]  %s572, 1024, %s570, %s557, 128, 256, 8
        $region48: #{tpu_custom_call.1} parent=39 // pred_fallthru
          _
      $region40: #{tpu_custom_call.1} parent=5 // pred_fallthru
        _
      %p578 = scmp.le.s32.totalorder 2, %s17
      // Predicated region
      $region49: #{tpu_custom_call.1} parent=5 // pred_check
        %p579 = pneg %p578
      $region50: #{tpu_custom_call.1} parent=5 // pred_check_branch
        %581 = sbr.rel (%p579) target = $region52
      $region51: #{tpu_custom_call.1} parent=5 // pred_region
        %s582 = ssub.s32 %s17, 2
        // Predicated region
        $region53: #{tpu_custom_call.1} parent=51 // pred_check
          %p583 = pneg %p172
        $region54: #{tpu_custom_call.1} parent=51 // pred_check_branch
          %585 = sbr.rel (%p583) target = $region56
        $region55: #{tpu_custom_call.1} parent=51 // pred_region
          %s586 = sand.u32 %s157, 1
          %s587 = scalar_lea.sflag [#allocation4], %s586
          %s588 = sand.u32 %s157, 1
          %s589 = smul.addr %s588, 64
          %s590 = scalar_lea.vmem [#allocation5], %s589
          %591 = dma.done %s587, 1024
        $region56: #{tpu_custom_call.1} parent=51 // pred_fallthru
          _
      $region52: #{tpu_custom_call.1} parent=5 // pred_fallthru
        _
    $region6: #{tpu_custom_call.1} parent=1 // loop_footer
      %s21 = sadd.s32 1, %s17
    $region7: #{tpu_custom_call.1} parent=1 // loop_footer_branch
      %16 = sbr.rel target = $region3
    $region8: #{tpu_custom_call.1} parent=1 // loop_exit
      _
    %592 = vsyncpa [#allocation3], 1
    %s593 = scalar_lea.sflag [#allocation3], 1
    %594 = vsyncpa %s593, 1
    %595 = vsyncpa [#allocation4], 1
    %s596 = scalar_lea.sflag [#allocation4], 1
    %597 = vsyncpa %s596, 1

</llo_original>
